<compile_context>
chip_gen: v5e
topology: v5e:2x2
jax: 0.10.0
libtpu: 0.0.40
codegen_flags: <defaults>
</compile_context>

<pallas_src>
import functools

import jax
import jax.numpy as jnp
from jax.experimental import pallas as pl
from jax.experimental.pallas import tpu as pltpu


# ---------------------------------------------------------------------------
# Kernels
# ---------------------------------------------------------------------------

def _resblock_identity_kernel(x_ref, w1_ref, b1_ref, w2_ref, b2_ref, o_ref):
    """ResBlock tile with identity shortcut (inchannel == outchannel).

    x_ref : (Cin, tl)      activations (channels on sublanes, length on lanes)
    w1_ref: (Cout, Cin)    b1_ref: (Cout, 1)
    w2_ref: (Cout, Cout)   b2_ref: (Cout, 1)
    o_ref : (Cout, tl)
    """
    x = x_ref[...]
    xc = x.astype(w1_ref.dtype)
    h = jnp.dot(w1_ref[...], xc, preferred_element_type=jnp.float32) + b1_ref[...]
    h = jnp.maximum(h, 0.0)
    left = jnp.dot(w2_ref[...], h.astype(w2_ref.dtype),
                   preferred_element_type=jnp.float32) + b2_ref[...]
    # identity shortcut: just add x (no matmul, no eye() weight in VMEM)
    o_ref[...] = jnp.maximum(left + x.astype(jnp.float32), 0.0).astype(o_ref.dtype)


def _resblock_conv_shortcut_kernel(x_ref, wcat_ref, bcat_ref, w2_ref, b2_ref,
                                   o_ref, *, cout):
    """ResBlock tile with 1x1-conv shortcut (inchannel != outchannel).

    conv1 and the shortcut conv share one MXU pass via row-concatenated weights.

    x_ref   : (Cin, tl)
    wcat_ref: (2*Cout, Cin)   rows [0:Cout]=conv1, rows [Cout:2*Cout]=shortcut
    bcat_ref: (2*Cout, 1)
    w2_ref  : (Cout, Cout)    b2_ref: (Cout, 1)
    o_ref   : (Cout, tl)
    """
    xc = x_ref[...].astype(wcat_ref.dtype)
    hs = jnp.dot(wcat_ref[...], xc, preferred_element_type=jnp.float32) + bcat_ref[...]
    h = jnp.maximum(hs[:cout, :], 0.0)     # conv1 + ReLU
    sc = hs[cout:, :]                      # shortcut conv
    left = jnp.dot(w2_ref[...], h.astype(w2_ref.dtype),
                   preferred_element_type=jnp.float32) + b2_ref[...]
    o_ref[...] = jnp.maximum(left + sc, 0.0).astype(o_ref.dtype)


# ---------------------------------------------------------------------------
# Wrapper
# ---------------------------------------------------------------------------

_DEFAULT_VMEM_LIMIT = 64 * 1024 * 1024


def _vmem_limit_bytes():
    """Clamp the scoped-VMEM request to the local chip (v7x has 64 MiB)."""
    try:
        cap = int(pltpu.get_tpu_info().vmem_capacity_bytes)
        return int(min(_DEFAULT_VMEM_LIMIT, (cap * 3) // 4))
    except Exception:
        return _DEFAULT_VMEM_LIMIT


def _choose_tl(L, Cin, Cout, bytes_per_elem, tl_max, vmem_budget):
    """Largest L tile (full L or a multiple of 128) within the VMEM budget."""
    if L <= tl_max:
        return L
    tl = tl_max
    # double-buffered x tile + out tile bytes per lane column
    per_col = 2 * (Cin + Cout) * bytes_per_elem
    while tl > 128 and tl * per_col > vmem_budget // 2:
        tl //= 2
    assert tl % 128 == 0, "tl_max must be a power-of-two multiple of 128"
    return tl


def resblock_forward(x, params, *, tl_max=1024, compute_dtype=jnp.bfloat16,
                     vmem_limit_bytes=None):
    """x: (N, Cin, L) NCL layout (same as PyTorch Conv1d). Returns (N, Cout, L).

    params: dict with
      w1: (Cout, Cin), b1: (Cout,)
      w2: (Cout, Cout), b2: (Cout,)
      ws: (Cout, Cin) or None (identity shortcut), bs: (Cout,) or None
    """
    N, Cin, L = x.shape
    w1 = jnp.asarray(params["w1"])
    b1 = jnp.asarray(params["b1"], jnp.float32)
    w2 = jnp.asarray(params["w2"])
    b2 = jnp.asarray(params["b2"], jnp.float32)
    ws = params["ws"]
    Cout = w1.shape[0]

    if vmem_limit_bytes is None:
        vmem_limit_bytes = _vmem_limit_bytes()

    # Weights cast once to the MXU compute dtype; biases stay f32 (added to the
    # f32-accumulated matmul result).
    w1c = w1.astype(compute_dtype)
    w2c = w2.astype(compute_dtype)
    b1r = b1.reshape(Cout, 1)
    b2r = b2.reshape(Cout, 1)

    tl = _choose_tl(L, Cin, Cout, x.dtype.itemsize, tl_max, vmem_limit_bytes)
    grid = (N, pl.cdiv(L, tl))  # ragged last L tile is masked by Pallas

    # NCL layout kept end-to-end: batch squeezed, channels on sublanes, L on lanes.
    x_spec = pl.BlockSpec((None, Cin, tl), lambda n, j: (n, 0, j))
    o_spec = pl.BlockSpec((None, Cout, tl), lambda n, j: (n, 0, j))

    def w_spec(shape):
        return pl.BlockSpec(shape, lambda n, j: (0, 0))   # resident weights

    cp = pltpu.CompilerParams(
        dimension_semantics=("parallel", "parallel"),
        vmem_limit_bytes=int(vmem_limit_bytes),
    )
    out_shape = jax.ShapeDtypeStruct((N, Cout, L), x.dtype)

    if ws is None:
        # identity shortcut (inchannel == outchannel): no shortcut matmul at all
        assert Cin == Cout
        return pl.pallas_call(
            _resblock_identity_kernel,
            out_shape=out_shape,
            grid=grid,
            in_specs=[x_spec,
                      w_spec((Cout, Cin)), w_spec((Cout, 1)),
                      w_spec((Cout, Cout)), w_spec((Cout, 1))],
            out_specs=o_spec,
            compiler_params=cp,
        )(x, w1c, b1r, w2c, b2r)

    # conv shortcut: fuse conv1 + shortcut into one (2*Cout, Cin) matmul
    wsc = jnp.asarray(ws).astype(compute_dtype)
    bsr = jnp.asarray(params["bs"], jnp.float32).reshape(Cout, 1)
    wcat = jnp.concatenate([w1c, wsc], axis=0)   # (2*Cout, Cin)
    bcat = jnp.concatenate([b1r, bsr], axis=0)   # (2*Cout, 1)

    kernel = functools.partial(_resblock_conv_shortcut_kernel, cout=Cout)
    return pl.pallas_call(
        kernel,
        out_shape=out_shape,
        grid=grid,
        in_specs=[x_spec,
                  w_spec((2 * Cout, Cin)), w_spec((2 * Cout, 1)),
                  w_spec((Cout, Cout)), w_spec((Cout, 1))],
        out_specs=o_spec,
        compiler_params=cp,
    )(x, wcat, bcat, w2c, b2r)


# ---------------------------------------------------------------------------
# Params + pure-JAX reference
# ---------------------------------------------------------------------------

def init_resblock_params(key, inchannel, outchannel):
    """Deterministic synthetic parameters with PyTorch Conv1d shapes (k=1)."""
    k1, k2, k3, k4, k5, k6 = jax.random.split(key, 6)
    scale = 0.1
    params = {
        "w1": scale * jax.random.normal(k1, (outchannel, inchannel), jnp.float32),
        "b1": scale * jax.random.normal(k2, (outchannel,), jnp.float32),
        "w2": scale * jax.random.normal(k3, (outchannel, outchannel), jnp.float32),
        "b2": scale * jax.random.normal(k4, (outchannel,), jnp.float32),
    }
    if inchannel != outchannel:
        params["ws"] = scale * jax.random.normal(k5, (outchannel, inchannel),
                                                 jnp.float32)
        params["bs"] = scale * jax.random.normal(k6, (outchannel,), jnp.float32)
    else:
        params["ws"] = None
        params["bs"] = None
    return params


def resblock_reference(x, params):
    """Pure-JAX reference of the PyTorch forward (kernel_size=1 path)."""
    w1, b1 = params["w1"], params["b1"]
    w2, b2 = params["w2"], params["b2"]
    ws, bs = params["ws"], params["bs"]
    hp = jax.lax.Precision.HIGHEST
    h = jnp.einsum("oc,ncl->nol", w1, x, precision=hp) + b1[None, :, None]
    h = jnp.maximum(h, 0.0)
    left = jnp.einsum("oc,ncl->nol", w2, h, precision=hp) + b2[None, :, None]
    if ws is None:
        sc = x
    else:
        sc = jnp.einsum("oc,ncl->nol", ws, x, precision=hp) + bs[None, :, None]
    return jnp.maximum(left + sc, 0.0)


# ---------------------------------------------------------------------------
# Self-test
# ---------------------------------------------------------------------------

if __name__ == "__main__":
    key = jax.random.PRNGKey(0)
    kx1, kx2, kx3, kp1, kp2, kp3 = jax.random.split(key, 6)

    def check(x, params, compute_dtype, atol, rtol, **kw):
        out = jax.block_until_ready(
            resblock_forward(x, params, compute_dtype=compute_dtype, **kw))
        ref = resblock_reference(x, params)
        assert out.shape == ref.shape, (out.shape, ref.shape)
        err = float(jnp.max(jnp.abs(out - ref)))
        assert jnp.allclose(out, ref, atol=atol, rtol=rtol), err

    # 1) conv-shortcut path (Cin != Cout), small shapes — exact f32 and bf16
    x1 = jax.random.normal(kx1, (2, 4, 16), jnp.float32)
    p1 = init_resblock_params(kp1, 4, 8)
    check(x1, p1, jnp.float32, 1e-4, 1e-4)
    check(x1, p1, jnp.bfloat16, 5e-2, 5e-2)

    # 2) identity-shortcut path (Cin == Cout)
    x2 = jax.random.normal(kx2, (2, 8, 16), jnp.float32)
    p2 = init_resblock_params(kp2, 8, 8)
    check(x2, p2, jnp.float32, 1e-4, 1e-4)
    check(x2, p2, jnp.bfloat16, 5e-2, 5e-2)

    # 3) multi-tile grid with a ragged last L tile (no wrapper padding)
    x3 = jax.random.normal(kx3, (1, 8, 1300), jnp.float32)
    p3 = init_resblock_params(kp3, 8, 16)
    check(x3, p3, jnp.float32, 1e-4, 1e-4, tl_max=512)

    print("KERNEL_OK")
</pallas_src>

<mosaic_0001>
module attributes {stable_mosaic.version = 11 : i64} {
  func.func @_resblock_conv_shortcut_kernel(%arg0: i32, %arg1: i32, %arg2: memref<1x4x16xf32, #tpu.memory_space<vmem>>, %arg3: memref<16x4xf32, #tpu.memory_space<vmem>>, %arg4: memref<16x1xf32, #tpu.memory_space<vmem>>, %arg5: memref<8x8xf32, #tpu.memory_space<vmem>>, %arg6: memref<8x1xf32, #tpu.memory_space<vmem>>, %arg7: memref<1x8x16xf32, #tpu.memory_space<vmem>>) attributes {dimension_semantics = [#tpu.dimension_semantics<parallel>, #tpu.dimension_semantics<parallel>], iteration_bounds = array<i64: 2, 1>, scalar_prefetch = 0 : i64, scratch_operands = 0 : i64, tpu.core_type = #tpu.core_type<tc>, window_params = [{transform_indices = @transform_0, window_bounds = array<i64: 1, 4, 16>}, {pipeline_mode = #tpu.pipeline_mode<synchronous>, transform_indices = @transform_1, window_bounds = array<i64: 16, 4>}, {pipeline_mode = #tpu.pipeline_mode<synchronous>, transform_indices = @transform_2, window_bounds = array<i64: 16, 1>}, {pipeline_mode = #tpu.pipeline_mode<synchronous>, transform_indices = @transform_3, window_bounds = array<i64: 8, 8>}, {pipeline_mode = #tpu.pipeline_mode<synchronous>, transform_indices = @transform_4, window_bounds = array<i64: 8, 1>}, {transform_indices = @transform_5, window_bounds = array<i64: 1, 8, 16>}]} {
    %c0 = arith.constant 0 : index
    %c0_0 = arith.constant 0 : index
    %c0_1 = arith.constant 0 : index
    %0 = vector.load %arg2[%c0, %c0_0, %c0_1] : memref<1x4x16xf32, #tpu.memory_space<vmem>>, vector<1x4x16xf32>
    %1 = vector.shape_cast %0 : vector<1x4x16xf32> to vector<4x16xf32>
    %c0_2 = arith.constant 0 : index
    %c0_3 = arith.constant 0 : index
    %2 = vector.load %arg3[%c0_2, %c0_3] : memref<16x4xf32, #tpu.memory_space<vmem>>, vector<16x4xf32>
    %cst = arith.constant dense<0.000000e+00> : vector<16x16xf32>
    %3 = tpu.matmul %2, %1, %cst {dimension_numbers = #tpu.dot_dimension_numbers<[1], [0], [0], [1], [0, 0, 1, 1], [], []>} : vector<16x4xf32>, vector<4x16xf32>, vector<16x16xf32> -> vector<16x16xf32>
    %c0_4 = arith.constant 0 : index
    %c0_5 = arith.constant 0 : index
    %4 = vector.load %arg4[%c0_4, %c0_5] : memref<16x1xf32, #tpu.memory_space<vmem>>, vector<16x1xf32>
    %5 = vector.broadcast %4 : vector<16x1xf32> to vector<16x16xf32>
    %6 = arith.addf %3, %5 : vector<16x16xf32>
    %7 = vector.extract_strided_slice %6 {offsets = [0, 0], sizes = [8, 16], strides = [1, 1]} : vector<16x16xf32> to vector<8x16xf32>
    %cst_6 = arith.constant 0.000000e+00 : f32
    %8 = vector.broadcast %cst_6 : f32 to vector<8x16xf32>
    %9 = arith.maximumf %7, %8 : vector<8x16xf32>
    %10 = vector.extract_strided_slice %6 {offsets = [8, 0], sizes = [8, 16], strides = [1, 1]} : vector<16x16xf32> to vector<8x16xf32>
    %c0_7 = arith.constant 0 : index
    %c0_8 = arith.constant 0 : index
    %11 = vector.load %arg5[%c0_7, %c0_8] : memref<8x8xf32, #tpu.memory_space<vmem>>, vector<8x8xf32>
    %cst_9 = arith.constant dense<0.000000e+00> : vector<8x16xf32>
    %12 = tpu.matmul %11, %9, %cst_9 {dimension_numbers = #tpu.dot_dimension_numbers<[1], [0], [0], [1], [0, 0, 1, 1], [], []>} : vector<8x8xf32>, vector<8x16xf32>, vector<8x16xf32> -> vector<8x16xf32>
    %c0_10 = arith.constant 0 : index
    %c0_11 = arith.constant 0 : index
    %13 = vector.load %arg6[%c0_10, %c0_11] : memref<8x1xf32, #tpu.memory_space<vmem>>, vector<8x1xf32>
    %14 = vector.broadcast %13 : vector<8x1xf32> to vector<8x16xf32>
    %15 = arith.addf %12, %14 : vector<8x16xf32>
    %16 = arith.addf %15, %10 : vector<8x16xf32>
    %cst_12 = arith.constant 0.000000e+00 : f32
    %17 = vector.broadcast %cst_12 : f32 to vector<8x16xf32>
    %18 = arith.maximumf %16, %17 : vector<8x16xf32>
    %c0_13 = arith.constant 0 : index
    %c0_14 = arith.constant 0 : index
    %c0_15 = arith.constant 0 : index
    %19 = vector.load %arg7[%c0_13, %c0_14, %c0_15] : memref<1x8x16xf32, #tpu.memory_space<vmem>>, vector<1x8x16xf32>
    %20 = vector.shape_cast %19 : vector<1x8x16xf32> to vector<8x16xf32>
    %21 = vector.shape_cast %18 : vector<8x16xf32> to vector<1x8x16xf32>
    tpu.vector_store %arg7[%c0_13, %c0_14, %c0_15], %21 {strides = array<i32>} : memref<1x8x16xf32, #tpu.memory_space<vmem>>, vector<1x8x16xf32>,
    return
  }
  func.func @transform_0(%arg0: i32, %arg1: i32) -> (i32, i32, i32) {
    %c0_i32 = arith.constant 0 : i32
    %c0_i32_0 = arith.constant 0 : i32
    return %arg0, %c0_i32, %arg1 : i32, i32, i32
  }
  func.func @transform_1(%arg0: i32, %arg1: i32) -> (i32, i32) {
    %c0_i32 = arith.constant 0 : i32
    %c0_i32_0 = arith.constant 0 : i32
    %c0_i32_1 = arith.constant 0 : i32
    return %c0_i32, %c0_i32_0 : i32, i32
  }
  func.func @transform_2(%arg0: i32, %arg1: i32) -> (i32, i32) {
    %c0_i32 = arith.constant 0 : i32
    %c0_i32_0 = arith.constant 0 : i32
    %c0_i32_1 = arith.constant 0 : i32
    return %c0_i32, %c0_i32_0 : i32, i32
  }
  func.func @transform_3(%arg0: i32, %arg1: i32) -> (i32, i32) {
    %c0_i32 = arith.constant 0 : i32
    %c0_i32_0 = arith.constant 0 : i32
    %c0_i32_1 = arith.constant 0 : i32
    return %c0_i32, %c0_i32_0 : i32, i32
  }
  func.func @transform_4(%arg0: i32, %arg1: i32) -> (i32, i32) {
    %c0_i32 = arith.constant 0 : i32
    %c0_i32_0 = arith.constant 0 : i32
    %c0_i32_1 = arith.constant 0 : i32
    return %c0_i32, %c0_i32_0 : i32, i32
  }
  func.func @transform_5(%arg0: i32, %arg1: i32) -> (i32, i32, i32) {
    %c0_i32 = arith.constant 0 : i32
    %c0_i32_0 = arith.constant 0 : i32
    return %arg0, %c0_i32, %arg1 : i32, i32, i32
  }
}

</mosaic_0001>

<llo_original>
// kernel: tpu_custom_call.1
$region0: #{tpu_custom_call.1}
  #allocation0 [shape = 'u32[]', space=smem, size = 0x4, offset = 0x4, fixed_abs, tag = 'smem constant byte address 0x4 - core index']
  #allocation1 [shape = 'u32[72,128]{1,0:T(1,128)}', space=vmem, size = 0x9000, scoped, tag = 'internal scratch']
  %s0 = inlined_call_operand.vmem [shape: f32[2,4,16], index: 0, kind: input, shape index: {}]
  %s1 = inlined_call_operand.vmem [shape: f32[16,4], index: 1, kind: input, shape index: {}]
  %s2 = inlined_call_operand.vmem [shape: f32[16,1], index: 2, kind: input, shape index: {}]
  %s3 = inlined_call_operand.vmem [shape: f32[8,8], index: 3, kind: input, shape index: {}]
  %s4 = inlined_call_operand.vmem [shape: f32[8,1], index: 4, kind: input, shape index: {}]
  %s5 = inlined_call_operand.hbm [shape: f32[2,8,16], index: 5, kind: output, shape index: {}]
  %s6 = sld [smem:[#allocation0]]
  $region53: #{tpu_custom_call.1} parent=0
    _
  %s8 = ssub.s32 1, %s6
  %s9 = scalar_select 0, %s8, %s6
  $region1: #{tpu_custom_call.1} parent=0
    #allocation2 [shape = 'u8[8192]{0}', space=vmem, size = 0x2000, scoped, tag = 'output window, operand 0']
    #allocation3 [shape = 's32[2]{0}', space=sflag, size = 0x8, scoped, tag = 'scoped memory for tpu_custom_call.1']
    %10 = vsyncpa [#allocation3], 0
    %s11 = scalar_lea.sflag [#allocation3], 1
    %12 = vsyncpa %s11, 0
    loop: start=0, step=1, limit=4
    $region2: #{tpu_custom_call.1} parent=1 // loop_pre_header
      _
    $region3: #{tpu_custom_call.1} parent=1 // loop_header
      %s14 = sphi 0, %s18
      %p15 = scmp.ge.s32.totalorder %s14, 4
      %s21 = sphi 0, %s33
      %s22 = sphi 0, %s29
      %s23 = sphi 0, %s21
      %s24 = sphi 0, %s22
      %s25 = sphi 0, %s23
      %s26 = sphi 0, %s24
      %s38 = sphi 0, %s40
      %s41 = sphi 0, %s38
      %s42 = sphi 0, %s41
      %s58 = sphi 0, %s42
      %s62 = sphi 0, %s62
      %s64 = sphi 0, %s62
      %s65 = sphi 0, %s64
      %s79 = sphi 0, %s65
      %s83 = sphi 0, %s83
      %s85 = sphi 0, %s83
      %s86 = sphi 0, %s85
      %s100 = sphi 0, %s86
      %s104 = sphi 0, %s104
      %s106 = sphi 0, %s104
      %s107 = sphi 0, %s106
      %s121 = sphi 0, %s107
      %s125 = sphi 0, %s125
      %s127 = sphi 0, %s125
      %s128 = sphi 0, %s127
      %s142 = sphi 0, %s128
      %s150 = sphi 0, %s152
      %s153 = sphi 0, %s150
      %s154 = sphi 0, %s153
      %s170 = sphi 0, %s154
    $region4: #{tpu_custom_call.1} parent=1 // loop_header_branch
      %17 = sbr.rel (%p15) target = $region8
    $region5: #{tpu_custom_call.1} parent=1 // loop_body
      %s19 = ssub.s32 %s14, 1
      %s20 = ssub.s32 %s14, 2
      %s27 = sadd.s32 1, %s22
      %p28 = scmp.ge.s32.totalorder %s27, 1
      %s29 = scalar_select %p28, 0, %s27
      %s30 = sadd.s32 1, %s21
      %s31 = scalar_select %p28, %s30, %s21
      %p32 = scmp.ge.s32.totalorder %s31, 2
      %s33 = scalar_select %p32, 0, %s31
      %s34 = ssub.s32 %s21, %s33
      %s35 = ssub.s32 %s22, %s29
      %s36 = sor.u32 %s34, %s35
      %p37 = scmp.eq.s32.totalorder %s36, 0
      %s39 = sadd.s32 %s38, 1
      %s40 = scalar_select %p37, %s38, %s39
      %p43 = pneg %p37
      %p44 = scmp.eq.s32.totalorder %s14, 1
      %p45 = por %p43, %p44
      %p46 = scmp.ne.s32.totalorder %s38, %s41
      %p47 = scmp.eq.s32.totalorder %s14, 0
      %p48 = por %p46, %p47
      %p49 = scmp.ne.s32.totalorder %s38, %s41
      %p50 = scmp.eq.s32.totalorder %s19, 1
      %p51 = por %p49, %p50
      %p52 = scmp.ne.s32.totalorder %s41, %s42
      %p53 = scmp.eq.s32.totalorder %s19, 0
      %p54 = por %p52, %p53
      %p55 = scmp.ne.s32.totalorder %s41, %s42
      %p56 = scmp.eq.s32.totalorder %s20, 1
      %p57 = por %p55, %p56
      %p59 = scmp.ne.s32.totalorder %s42, %s58
      %p60 = scmp.eq.s32.totalorder %s20, 0
      %p61 = por %p59, %p60
      %s63 = sadd.s32 %s62, 1
      %p66 = scmp.eq.s32.totalorder %s14, 1
      %p67 = scmp.ne.s32.totalorder %s62, %s64
      %p68 = scmp.eq.s32.totalorder %s14, 0
      %p69 = por %p67, %p68
      %p70 = scmp.ne.s32.totalorder %s62, %s64
      %p71 = scmp.eq.s32.totalorder %s19, 1
      %p72 = por %p70, %p71
      %p73 = scmp.ne.s32.totalorder %s64, %s65
      %p74 = scmp.eq.s32.totalorder %s19, 0
      %p75 = por %p73, %p74
      %p76 = scmp.ne.s32.totalorder %s64, %s65
      %p77 = scmp.eq.s32.totalorder %s20, 1
      %p78 = por %p76, %p77
      %p80 = scmp.ne.s32.totalorder %s65, %s79
      %p81 = scmp.eq.s32.totalorder %s20, 0
      %p82 = por %p80, %p81
      %s84 = sadd.s32 %s83, 1
      %p87 = scmp.eq.s32.totalorder %s14, 1
      %p88 = scmp.ne.s32.totalorder %s83, %s85
      %p89 = scmp.eq.s32.totalorder %s14, 0
      %p90 = por %p88, %p89
      %p91 = scmp.ne.s32.totalorder %s83, %s85
      %p92 = scmp.eq.s32.totalorder %s19, 1
      %p93 = por %p91, %p92
      %p94 = scmp.ne.s32.totalorder %s85, %s86
      %p95 = scmp.eq.s32.totalorder %s19, 0
      %p96 = por %p94, %p95
      %p97 = scmp.ne.s32.totalorder %s85, %s86
      %p98 = scmp.eq.s32.totalorder %s20, 1
      %p99 = por %p97, %p98
      %p101 = scmp.ne.s32.totalorder %s86, %s100
      %p102 = scmp.eq.s32.totalorder %s20, 0
      %p103 = por %p101, %p102
      %s105 = sadd.s32 %s104, 1
      %p108 = scmp.eq.s32.totalorder %s14, 1
      %p109 = scmp.ne.s32.totalorder %s104, %s106
      %p110 = scmp.eq.s32.totalorder %s14, 0
      %p111 = por %p109, %p110
      %p112 = scmp.ne.s32.totalorder %s104, %s106
      %p113 = scmp.eq.s32.totalorder %s19, 1
      %p114 = por %p112, %p113
      %p115 = scmp.ne.s32.totalorder %s106, %s107
      %p116 = scmp.eq.s32.totalorder %s19, 0
      %p117 = por %p115, %p116
      %p118 = scmp.ne.s32.totalorder %s106, %s107
      %p119 = scmp.eq.s32.totalorder %s20, 1
      %p120 = por %p118, %p119
      %p122 = scmp.ne.s32.totalorder %s107, %s121
      %p123 = scmp.eq.s32.totalorder %s20, 0
      %p124 = por %p122, %p123
      %s126 = sadd.s32 %s125, 1
      %p129 = scmp.eq.s32.totalorder %s14, 1
      %p130 = scmp.ne.s32.totalorder %s125, %s127
      %p131 = scmp.eq.s32.totalorder %s14, 0
      %p132 = por %p130, %p131
      %p133 = scmp.ne.s32.totalorder %s125, %s127
      %p134 = scmp.eq.s32.totalorder %s19, 1
      %p135 = por %p133, %p134
      %p136 = scmp.ne.s32.totalorder %s127, %s128
      %p137 = scmp.eq.s32.totalorder %s19, 0
      %p138 = por %p136, %p137
      %p139 = scmp.ne.s32.totalorder %s127, %s128
      %p140 = scmp.eq.s32.totalorder %s20, 1
      %p141 = por %p139, %p140
      %p143 = scmp.ne.s32.totalorder %s128, %s142
      %p144 = scmp.eq.s32.totalorder %s20, 0
      %p145 = por %p143, %p144
      %s146 = ssub.s32 %s21, %s33
      %s147 = ssub.s32 %s22, %s29
      %s148 = sor.u32 %s146, %s147
      %p149 = scmp.eq.s32.totalorder %s148, 0
      %s151 = sadd.s32 %s150, 1
      %s152 = scalar_select %p149, %s150, %s151
      %p155 = pneg %p149
      %p156 = scmp.eq.s32.totalorder %s14, 1
      %p157 = por %p155, %p156
      %p158 = scmp.ne.s32.totalorder %s150, %s153
      %p159 = scmp.eq.s32.totalorder %s14, 0
      %p160 = por %p158, %p159
      %p161 = scmp.ne.s32.totalorder %s150, %s153
      %p162 = scmp.eq.s32.totalorder %s19, 1
      %p163 = por %p161, %p162
      %p164 = scmp.ne.s32.totalorder %s153, %s154
      %p165 = scmp.eq.s32.totalorder %s19, 0
      %p166 = por %p164, %p165
      %p167 = scmp.ne.s32.totalorder %s153, %s154
      %p168 = scmp.eq.s32.totalorder %s20, 1
      %p169 = por %p167, %p168
      %p171 = scmp.ne.s32.totalorder %s154, %s170
      %p172 = scmp.eq.s32.totalorder %s20, 0
      %p173 = por %p171, %p172
      %p174 = scmp.le.s32.totalorder 1, %s14
      %p175 = scmp.lt.s32.totalorder %s14, 3
      %p176 = pnand %p174, %p175
      %p177 = pneg %p176
      // Predicated region
      $region9: #{tpu_custom_call.1} parent=5 // pred_check
        _
      $region10: #{tpu_custom_call.1} parent=5 // pred_check_branch
        %179 = sbr.rel (%p176) target = $region12
      $region11: #{tpu_custom_call.1} parent=5 // pred_region
        %s180 = ssub.s32 %s14, 1
        // Predicated region
        $region13: #{tpu_custom_call.1} parent=11 // pred_check
          %p181 = pneg %p75
        $region14: #{tpu_custom_call.1} parent=11 // pred_check_branch
          %183 = sbr.rel (%p181) target = $region16
        $region15: #{tpu_custom_call.1} parent=11 // pred_region
          _
        $region16: #{tpu_custom_call.1} parent=11 // pred_fallthru
          _
        // Predicated region
        $region17: #{tpu_custom_call.1} parent=11 // pred_check
          %p184 = pneg %p96
        $region18: #{tpu_custom_call.1} parent=11 // pred_check_branch
          %186 = sbr.rel (%p184) target = $region20
        $region19: #{tpu_custom_call.1} parent=11 // pred_region
          _
        $region20: #{tpu_custom_call.1} parent=11 // pred_fallthru
          _
        // Predicated region
        $region21: #{tpu_custom_call.1} parent=11 // pred_check
          %p187 = pneg %p117
        $region22: #{tpu_custom_call.1} parent=11 // pred_check_branch
          %189 = sbr.rel (%p187) target = $region24
        $region23: #{tpu_custom_call.1} parent=11 // pred_region
          _
        $region24: #{tpu_custom_call.1} parent=11 // pred_fallthru
          _
        // Predicated region
        $region25: #{tpu_custom_call.1} parent=11 // pred_check
          %p190 = pneg %p138
        $region26: #{tpu_custom_call.1} parent=11 // pred_check_branch
          %192 = sbr.rel (%p190) target = $region28
        $region27: #{tpu_custom_call.1} parent=11 // pred_region
          _
        $region28: #{tpu_custom_call.1} parent=11 // pred_fallthru
          _
      $region12: #{tpu_custom_call.1} parent=5 // pred_fallthru
        _
      %p193 = scmp.lt.s32.totalorder %s14, 2
      // Predicated region
      $region29: #{tpu_custom_call.1} parent=5 // pred_check
        %p194 = pneg %p193
      $region30: #{tpu_custom_call.1} parent=5 // pred_check_branch
        %196 = sbr.rel (%p194) target = $region32
      $region31: #{tpu_custom_call.1} parent=5 // pred_region
        // Predicated region
        $region33: #{tpu_custom_call.1} parent=31 // pred_check
          %p197 = pneg %p48
        $region34: #{tpu_custom_call.1} parent=31 // pred_check_branch
          %199 = sbr.rel (%p197) target = $region36
        $region35: #{tpu_custom_call.1} parent=31 // pred_region
          %p200 = scmp.lt.s32.totalorder %s21, 1
          %s201 = scalar_select %p200, %s21, 1
          %p202 = scmp.lt.s32.totalorder %s22, 0
          %s203 = scalar_select %p202, %s22, 0
          %s204 = sadd.s32 %s203, %s201
          %s205 = smul.addr %s204, 4
          %s206 = scalar_lea.vmem %s0, %s205
        $region36: #{tpu_custom_call.1} parent=31 // pred_fallthru
          _
      $region32: #{tpu_custom_call.1} parent=5 // pred_fallthru
        _
      %p207 = scmp.le.s32.totalorder 1, %s14
      %p208 = scmp.lt.s32.totalorder %s14, 3
      %p209 = pnand %p207, %p208
      %p210 = pneg %p209
      // Predicated region
      $region37: #{tpu_custom_call.1} parent=5 // pred_check
        _
      $region38: #{tpu_custom_call.1} parent=5 // pred_check_branch
        %212 = sbr.rel (%p209) target = $region40
      $region39: #{tpu_custom_call.1} parent=5 // pred_region
        %s213 = ssub.s32 %s14, 1
        %p214 = scmp.lt.s32.totalorder %s23, 1
        %s215 = scalar_select %p214, %s23, 1
        %p216 = scmp.lt.s32.totalorder %s24, 0
        %s217 = scalar_select %p216, %s24, 0
        %s218 = sadd.s32 %s217, %s215
        %s219 = smul.addr %s218, 4
        %s220 = scalar_lea.vmem %s0, %s219
        %p221 = pneg %p54
        %p222 = pneg %p51
        %p223 = pneg %p75
        %p224 = pneg %p72
        %p225 = pneg %p96
        %p226 = pneg %p93
        %p227 = pneg %p117
        %p228 = pneg %p114
        %p229 = pneg %p138
        %p230 = pneg %p135
        %p231 = pneg %p166
        %p232 = pneg %p163
        %s233 = sand.u32 %s153, 1
        %s234 = scalar_lea.sflag [#allocation3], %s233
        %s235 = sand.u32 %s153, 1
        %s236 = smul.addr %s235, 8
        %s237 = scalar_lea.vmem [#allocation2], %s236
        %p238 = scmp.lt.s32.totalorder %s23, 1
        %s239 = scalar_select %p238, %s23, 1
        %p240 = scmp.lt.s32.totalorder %s24, 0
        %s241 = scalar_select %p240, %s24, 0
        %s242 = sadd.s32 %s241, %s239
        %s243 = smul.addr %s242, 4
        %s244 = scalar_lea.vmem %s0, %s243
        %v245 = vld [vmem:[%s244] sm:$0xf]
        %v246 = vld [vmem:[%s1] sm:$0xff]
        %v247 = vld [vmem:[%s1 + $0x8] sm:$0xff]
        %v248 = vld [vmem:[%s2] sm:$0xff]
        %v249 = vld [vmem:[%s2 + $0x8] sm:$0xff]
        %251 = vset.pattern.permute.xlu0 0
        %252 = vperm.xlu0 %251, %v248
        %v253 = vpop.permute.xlu0 %252
        %256 = vset.pattern.permute.xlu0 0
        %257 = vperm.xlu0 %256, %v249
        %v258 = vpop.permute.xlu0 %257
        %vm260 = vcmask 31744
        %v262 = vsel %vm260, %v246, 0
        %v265 = vsel %vm260, %v247, 0
        %vm267 = vcmask 1043456
        %v269 = vsel %vm267, %v245, 0
        %271 = vmatpush.msra.mxu0 0.0
        %272 = vmatpush.msra.mxu0 0.0
        %273 = vmatpush.msra.mxu0 0.0
        %274 = vmatpush.msra.mxu0 0.0
        %275 = vmatpush.msra.mxu0 0.0
        %276 = vmatpush.msra.mxu0 0.0
        %277 = vmatpush.msra.mxu0 0.0
        %278 = vmatpush.msra.mxu0 0.0
        %279 = vmatpush.msra.mxu0 0.0
        %280 = vmatpush.msra.mxu0 0.0
        %281 = vmatpush.msra.mxu0 0.0
        %282 = vmatpush.msra.mxu0 0.0
        %283 = vmatpush.msra.mxu0 0.0
        %284 = vmatpush.msra.mxu0 0.0
        %285 = vmatpush.msra.mxu0 0.0
        %286 = vmatpush.msra.mxu0 %v269
        %287 = vmatmul.f32.gmra.mxu0 %v262
        %v288 = vpop.f32.mrf.mxu0
        %v289 = vadd.f32 %v253, %v288
        %290 = vmatmul.f32.gmra.mxu0 %v265
        %v291 = vpop.f32.mrf.mxu0
        %v292 = vadd.f32 %v258, %v291
        %293 = vdwg.mxu0
        %v294 = vmax.f32 %v289, 0.0
        %v295 = vld [vmem:[%s3] sm:$0xff]
        %v296 = vld [vmem:[%s4] sm:$0xff]
        %298 = vset.pattern.permute.xlu0 0
        %299 = vperm.xlu0 %298, %v296
        %v300 = vpop.permute.xlu0 %299
        %vm302 = vcmask 64512
        %v304 = vsel %vm302, %v295, 0
        %306 = vmatpush.msra.mxu0 0.0
        %307 = vmatpush.msra.mxu0 0.0
        %308 = vmatpush.msra.mxu0 0.0
        %309 = vmatpush.msra.mxu0 0.0
        %310 = vmatpush.msra.mxu0 0.0
        %311 = vmatpush.msra.mxu0 0.0
        %312 = vmatpush.msra.mxu0 0.0
        %313 = vmatpush.msra.mxu0 0.0
        %314 = vmatpush.msra.mxu0 0.0
        %315 = vmatpush.msra.mxu0 0.0
        %316 = vmatpush.msra.mxu0 0.0
        %317 = vmatpush.msra.mxu0 0.0
        %318 = vmatpush.msra.mxu0 0.0
        %319 = vmatpush.msra.mxu0 0.0
        %320 = vmatpush.msra.mxu0 0.0
        %321 = vmatpush.msra.mxu0 %v294
        %322 = vmatmul.f32.gmra.mxu0 %v304
        %v323 = vpop.f32.mrf.mxu0
        %v324 = vadd.f32 %v300, %v323
        %325 = vdwg.mxu0
        %v326 = vadd.f32 %v324, %v292
        %v327 = vmax.f32 %v326, 0.0
        %vm328 = vcmask 130048
        %329 = vst.msk [vmem:[%s237] sm:$0xff] %vm328, %v327
        %s330 = sand.u32 %s153, 1
        %s331 = scalar_lea.sflag [#allocation3], %s330
        %s332 = sand.u32 %s153, 1
        %s333 = smul.addr %s332, 8
        %s334 = scalar_lea.vmem [#allocation2], %s333
        // Predicated region
        $region41: #{tpu_custom_call.1} parent=39 // pred_check
          %p335 = pneg %p163
        $region42: #{tpu_custom_call.1} parent=39 // pred_check_branch
          %337 = sbr.rel (%p335) target = $region44
        $region43: #{tpu_custom_call.1} parent=39 // pred_region
          %339 = vsyncadd %s331, 0
          %s340 = sadd.s32 %s24, %s23
          %s341 = smul.addr %s340, 8
          %s342 = scalar_lea.hbm %s5, %s341
          %s344 = sshll.u32 %s334, 4
          %s345 = int_to_ptr.vmem [resolvable:$true] %s344
          %s346 = sshll.u32 %s342, 4
          %s347 = int_to_ptr.hbm [resolvable:$true] %s346
          %349 = dma.vmem_to_hbm [thread:$0]  %s345, 128, %s347, %s331
        $region44: #{tpu_custom_call.1} parent=39 // pred_fallthru
          _
      $region40: #{tpu_custom_call.1} parent=5 // pred_fallthru
        _
      %p350 = scmp.le.s32.totalorder 2, %s14
      // Predicated region
      $region45: #{tpu_custom_call.1} parent=5 // pred_check
        %p351 = pneg %p350
      $region46: #{tpu_custom_call.1} parent=5 // pred_check_branch
        %353 = sbr.rel (%p351) target = $region48
      $region47: #{tpu_custom_call.1} parent=5 // pred_region
        %s354 = ssub.s32 %s14, 2
        // Predicated region
        $region49: #{tpu_custom_call.1} parent=47 // pred_check
          %p355 = pneg %p169
        $region50: #{tpu_custom_call.1} parent=47 // pred_check_branch
          %357 = sbr.rel (%p355) target = $region52
        $region51: #{tpu_custom_call.1} parent=47 // pred_region
          %s358 = sand.u32 %s154, 1
          %s359 = scalar_lea.sflag [#allocation3], %s358
          %s360 = sand.u32 %s154, 1
          %s361 = smul.addr %s360, 8
          %s362 = scalar_lea.vmem [#allocation2], %s361
          %364 = dma.done %s359, 128
        $region52: #{tpu_custom_call.1} parent=47 // pred_fallthru
          _
      $region48: #{tpu_custom_call.1} parent=5 // pred_fallthru
        _
    $region6: #{tpu_custom_call.1} parent=1 // loop_footer
      %s18 = sadd.s32 1, %s14
    $region7: #{tpu_custom_call.1} parent=1 // loop_footer_branch
      %13 = sbr.rel target = $region3
    $region8: #{tpu_custom_call.1} parent=1 // loop_exit
      _
    %365 = vsyncpa [#allocation3], 1
    %s366 = scalar_lea.sflag [#allocation3], 1
    %367 = vsyncpa %s366, 1

</llo_original>
